<compile_context>
chip_gen: v5e
topology: v5e:2x2
jax: 0.10.0
libtpu: 0.0.40
codegen_flags: <defaults>
</compile_context>

<pallas_src>
import functools

import jax
import jax.numpy as jnp
import numpy as np
from jax.experimental import pallas as pl
from jax.experimental.pallas import tpu as pltpu


# ---------------------------------------------------------------------------
# Kernel: row-wise LayerNorm over the last (feature) dimension.
#   x_ref: (tm, D)   a_ref/b_ref: (1, D)   o_ref: (tm, D)
# ---------------------------------------------------------------------------
def _layernorm_kernel(x_ref, a_ref, b_ref, o_ref, *, eps, feat):
    x = x_ref[...].astype(jnp.float32)                      # (tm, D)
    mean = jnp.mean(x, axis=-1, keepdims=True)              # (tm, 1)
    xc = x - mean
    # torch.std() uses Bessel's correction (divide by N-1).
    var = jnp.sum(xc * xc, axis=-1, keepdims=True) * (1.0 / (feat - 1.0))
    std = jnp.sqrt(var)
    inv = 1.0 / (std + eps)                                 # eps on std (PyTorch)
    a = a_ref[...].astype(jnp.float32)                      # (1, D) broadcast
    b = b_ref[...].astype(jnp.float32)
    y = a * (xc * inv) + b
    o_ref[...] = y.astype(o_ref.dtype)


def pallas_layer_norm(x, a, b, eps=1e-6, *, max_rows_per_tile=512):
    """x: (..., D), a/b: (D,) -> (..., D). Single fused Pallas call."""
    orig_shape = x.shape
    D = orig_shape[-1]
    M = int(np.prod(orig_shape[:-1]))
    x2d = x.reshape(M, D)
    a2d = a.reshape(1, D)
    b2d = b.reshape(1, D)

    # Row tile: whole problem in one step when small, otherwise 512-row tiles
    # (multiple of 8 sublanes) so the DMA pipeline stays full. Rows are
    # independent, so a padded trailing tile is harmless (stores are masked).
    tm = M if M <= max_rows_per_tile else max_rows_per_tile
    grid = (pl.cdiv(M, tm),)

    kernel = functools.partial(_layernorm_kernel, eps=float(eps), feat=float(D))

    out = pl.pallas_call(
        kernel,
        out_shape=jax.ShapeDtypeStruct((M, D), x.dtype),
        grid=grid,
        in_specs=[
            pl.BlockSpec((tm, D), lambda i: (i, 0)),   # activations, row-tiled
            pl.BlockSpec((1, D), lambda i: (0, 0)),    # scale (resident)
            pl.BlockSpec((1, D), lambda i: (0, 0)),    # shift (resident)
        ],
        out_specs=pl.BlockSpec((tm, D), lambda i: (i, 0)),
        compiler_params=pltpu.CompilerParams(
            dimension_semantics=("parallel",),         # megacore sharding on v7x
        ),
    )(x2d, a2d, b2d)
    return out.reshape(orig_shape)


# ---------------------------------------------------------------------------
# Pure-JAX reference matching the PyTorch module exactly.
# ---------------------------------------------------------------------------
def reference_layer_norm(x, a, b, eps=1e-6):
    mean = jnp.mean(x, axis=-1, keepdims=True)
    std = jnp.std(x, axis=-1, keepdims=True, ddof=1)   # unbiased, like torch.std
    return a * (x - mean) / (std + eps) + b


if __name__ == "__main__":
    # Small shapes consistent with the module usage:
    # batch N=2, patch_number (seq) S=8, individual_featured D=32.
    N, S, D = 2, 8, 32

    root = jax.random.PRNGKey(0)
    kx, ka, kb = jax.random.split(root, 3)
    x = jax.random.normal(kx, (N, S, D), jnp.float32)
    # Module init is a=ones, b=zeros; perturb slightly so the affine params
    # are actually exercised by the check.
    a = jnp.ones((D,), jnp.float32) + 0.1 * jax.random.normal(ka, (D,), jnp.float32)
    b = 0.1 * jax.random.normal(kb, (D,), jnp.float32)

    out = pallas_layer_norm(x, a, b)
    out = jax.block_until_ready(out)

    ref = reference_layer_norm(x, a, b)
    assert out.shape == x.shape
    np.testing.assert_allclose(np.asarray(out), np.asarray(ref),
                               rtol=1e-5, atol=1e-5)

    print("KERNEL_OK")
</pallas_src>

<mosaic_0001>
module attributes {stable_mosaic.version = 11 : i64} {
  func.func @_layernorm_kernel(%arg0: i32, %arg1: memref<16x32xf32, #tpu.memory_space<vmem>>, %arg2: memref<1x32xf32, #tpu.memory_space<vmem>>, %arg3: memref<1x32xf32, #tpu.memory_space<vmem>>, %arg4: memref<16x32xf32, #tpu.memory_space<vmem>>) attributes {dimension_semantics = [#tpu.dimension_semantics<parallel>], iteration_bounds = array<i64: 1>, scalar_prefetch = 0 : i64, scratch_operands = 0 : i64, tpu.core_type = #tpu.core_type<tc>, window_params = [{transform_indices = @transform_0, window_bounds = array<i64: 16, 32>}, {pipeline_mode = #tpu.pipeline_mode<synchronous>, transform_indices = @transform_1, window_bounds = array<i64: 1, 32>}, {pipeline_mode = #tpu.pipeline_mode<synchronous>, transform_indices = @transform_2, window_bounds = array<i64: 1, 32>}, {transform_indices = @transform_3, window_bounds = array<i64: 16, 32>}]} {
    %c0 = arith.constant 0 : index
    %c0_0 = arith.constant 0 : index
    %0 = vector.load %arg1[%c0, %c0_0] : memref<16x32xf32, #tpu.memory_space<vmem>>, vector<16x32xf32>
    %cst = arith.constant dense<0.000000e+00> : vector<16xf32>
    %1 = vector.multi_reduction <add>, %0, %cst [1] : vector<16x32xf32> to vector<16xf32>
    %2 = vector.shape_cast %1 : vector<16xf32> to vector<16x1xf32>
    %cst_1 = arith.constant 3.200000e+01 : f32
    %3 = vector.broadcast %cst_1 : f32 to vector<16x1xf32>
    %4 = arith.divf %2, %3 : vector<16x1xf32>
    %5 = vector.broadcast %4 : vector<16x1xf32> to vector<16x32xf32>
    %6 = arith.subf %0, %5 : vector<16x32xf32>
    %7 = arith.mulf %6, %6 : vector<16x32xf32>
    %cst_2 = arith.constant dense<0.000000e+00> : vector<16xf32>
    %8 = vector.multi_reduction <add>, %7, %cst_2 [1] : vector<16x32xf32> to vector<16xf32>
    %9 = vector.shape_cast %8 : vector<16xf32> to vector<16x1xf32>
    %cst_3 = arith.constant 0.0322580636 : f32
    %10 = vector.broadcast %cst_3 : f32 to vector<16x1xf32>
    %11 = arith.mulf %9, %10 : vector<16x1xf32>
    %12 = math.sqrt %11 : vector<16x1xf32>
    %cst_4 = arith.constant 9.99999997E-7 : f32
    %13 = vector.broadcast %cst_4 : f32 to vector<16x1xf32>
    %14 = arith.addf %12, %13 : vector<16x1xf32>
    %cst_5 = arith.constant 1.000000e+00 : f32
    %15 = vector.broadcast %cst_5 : f32 to vector<16x1xf32>
    %16 = arith.divf %15, %14 : vector<16x1xf32>
    %c0_6 = arith.constant 0 : index
    %c0_7 = arith.constant 0 : index
    %17 = vector.load %arg2[%c0_6, %c0_7] : memref<1x32xf32, #tpu.memory_space<vmem>>, vector<1x32xf32>
    %c0_8 = arith.constant 0 : index
    %c0_9 = arith.constant 0 : index
    %18 = vector.load %arg3[%c0_8, %c0_9] : memref<1x32xf32, #tpu.memory_space<vmem>>, vector<1x32xf32>
    %19 = vector.broadcast %16 : vector<16x1xf32> to vector<16x32xf32>
    %20 = arith.mulf %6, %19 : vector<16x32xf32>
    %21 = vector.broadcast %17 : vector<1x32xf32> to vector<16x32xf32>
    %22 = arith.mulf %21, %20 : vector<16x32xf32>
    %23 = vector.broadcast %18 : vector<1x32xf32> to vector<16x32xf32>
    %24 = arith.addf %22, %23 : vector<16x32xf32>
    %c0_10 = arith.constant 0 : index
    %c0_11 = arith.constant 0 : index
    %25 = vector.load %arg4[%c0_10, %c0_11] : memref<16x32xf32, #tpu.memory_space<vmem>>, vector<16x32xf32>
    tpu.vector_store %arg4[%c0_10, %c0_11], %24 {strides = array<i32>} : memref<16x32xf32, #tpu.memory_space<vmem>>, vector<16x32xf32>,
    return
  }
  func.func @transform_0(%arg0: i32) -> (i32, i32) {
    %c0_i32 = arith.constant 0 : i32
    %c0_i32_0 = arith.constant 0 : i32
    return %arg0, %c0_i32 : i32, i32
  }
  func.func @transform_1(%arg0: i32) -> (i32, i32) {
    %c0_i32 = arith.constant 0 : i32
    %c0_i32_0 = arith.constant 0 : i32
    %c0_i32_1 = arith.constant 0 : i32
    return %c0_i32, %c0_i32_0 : i32, i32
  }
  func.func @transform_2(%arg0: i32) -> (i32, i32) {
    %c0_i32 = arith.constant 0 : i32
    %c0_i32_0 = arith.constant 0 : i32
    %c0_i32_1 = arith.constant 0 : i32
    return %c0_i32, %c0_i32_0 : i32, i32
  }
  func.func @transform_3(%arg0: i32) -> (i32, i32) {
    %c0_i32 = arith.constant 0 : i32
    %c0_i32_0 = arith.constant 0 : i32
    return %arg0, %c0_i32 : i32, i32
  }
}

</mosaic_0001>

<llo_original>
// kernel: tpu_custom_call.1
$region0: #{tpu_custom_call.1}
  #allocation0 [shape = 'u32[]', space=smem, size = 0x4, offset = 0x4, fixed_abs, tag = 'smem constant byte address 0x4 - core index']
  #allocation1 [shape = 'u32[72,128]{1,0:T(1,128)}', space=vmem, size = 0x9000, scoped, tag = 'internal scratch']
  %s0 = inlined_call_operand.hbm [shape: f32[16,32], index: 0, kind: input, shape index: {}]
  %s1 = inlined_call_operand.hbm [shape: f32[1,32], index: 1, kind: input, shape index: {}]
  %s2 = inlined_call_operand.vmem [shape: f32[1,32], index: 2, kind: input, shape index: {}]
  %s3 = inlined_call_operand.hbm [shape: f32[16,32], index: 3, kind: output, shape index: {}]
  %s4 = sld [smem:[#allocation0]]
  $region30: #{tpu_custom_call.1} parent=0
    _
  %s6 = ssub.s32 1, %s4
  %s7 = scalar_select 0, %s6, %s4
  $region1: #{tpu_custom_call.1} parent=0
    #allocation2 [shape = 'u8[8192]{0}', space=vmem, size = 0x2000, scoped, tag = 'input window, operand 0, single buffered']
    #allocation3 [shape = 's32[1]{0}', space=sflag, size = 0x4, scoped, tag = 'scoped memory for tpu_custom_call.1']
    #allocation4 [shape = 's32[1]{0}', space=sflag, size = 0x4, scoped, tag = 'scoped memory for tpu_custom_call.1']
    #allocation5 [shape = 'u8[512]{0}', space=vmem, size = 0x400, scoped, tag = 'input window, operand 1, single buffered']
    #allocation6 [shape = 's32[1]{0}', space=sflag, size = 0x4, scoped, tag = 'scoped memory for tpu_custom_call.1']
    #allocation7 [shape = 'u8[8192]{0}', space=vmem, size = 0x2000, scoped, tag = 'output window, operand 0, single buffered']
    %8 = vsyncpa [#allocation3], 0
    %9 = vsyncpa [#allocation6], 0
    %10 = vsyncpa [#allocation4], 0
    // Predicated region
    $region2: #{tpu_custom_call.1} parent=1 // pred_check
      _
    $region3: #{tpu_custom_call.1} parent=1 // pred_check_branch
      %12 = sbr.rel (0) target = $region5
    $region4: #{tpu_custom_call.1} parent=1 // pred_region
      %14 = vsyncadd [#allocation3], 0
      %s15 = sshll.u32 %s0, 4
      %s16 = int_to_ptr.hbm [resolvable:$true] %s15
      %s17 = sshll.u32 [#allocation2], 4
      %s18 = int_to_ptr.vmem [resolvable:$true] %s17
      %23 = dma.hbm_to_vmem [thread:$0]  %s16, 256, %s18, [#allocation3], 128, 128, 8
    $region5: #{tpu_custom_call.1} parent=1 // pred_fallthru
      _
    // Predicated region
    $region6: #{tpu_custom_call.1} parent=1 // pred_check
      _
    $region7: #{tpu_custom_call.1} parent=1 // pred_check_branch
      %25 = sbr.rel (0) target = $region9
    $region8: #{tpu_custom_call.1} parent=1 // pred_region
      %27 = vsyncadd [#allocation6], 0
      %s29 = sshll.u32 %s1, 4
      %s30 = int_to_ptr.hbm [resolvable:$true] %s29
      %s31 = sshll.u32 [#allocation5], 4
      %s32 = int_to_ptr.vmem [resolvable:$true] %s31
      %34 = dma.hbm_to_vmem [thread:$0]  %s30, 16, %s32, [#allocation6]
    $region9: #{tpu_custom_call.1} parent=1 // pred_fallthru
      _
    // Predicated region
    $region10: #{tpu_custom_call.1} parent=1 // pred_check
      _
    $region11: #{tpu_custom_call.1} parent=1 // pred_check_branch
      %36 = sbr.rel (0) target = $region13
    $region12: #{tpu_custom_call.1} parent=1 // pred_region
      _
    $region13: #{tpu_custom_call.1} parent=1 // pred_fallthru
      _
    // Predicated region
    $region14: #{tpu_custom_call.1} parent=1 // pred_check
      _
    $region15: #{tpu_custom_call.1} parent=1 // pred_check_branch
      %38 = sbr.rel (0) target = $region17
    $region16: #{tpu_custom_call.1} parent=1 // pred_region
      %40 = dma.done [#allocation3], 256
    $region17: #{tpu_custom_call.1} parent=1 // pred_fallthru
      _
    // Predicated region
    $region18: #{tpu_custom_call.1} parent=1 // pred_check
      _
    $region19: #{tpu_custom_call.1} parent=1 // pred_check_branch
      %42 = sbr.rel (0) target = $region21
    $region20: #{tpu_custom_call.1} parent=1 // pred_region
      %44 = dma.done [#allocation6], 16
    $region21: #{tpu_custom_call.1} parent=1 // pred_fallthru
      _
    %v45 = vld [vmem:[#allocation2] sm:$0xff]
    %v46 = vld [vmem:[#allocation2 + $0x8] sm:$0xff]
    %vm47 = vcmask 261120
    %v48 = vsel %vm47, %v45, 0.0
    %49 = vadd.xlane.f32.xlu0 %v48
    %v50 = vpop.xlane.xlu0 %49
    %v51 = vsel %vm47, %v46, 0.0
    %52 = vadd.xlane.f32.xlu0 %v51
    %v53 = vpop.xlane.xlu0 %52
    %v54 = vrcp.pop 32.0
    %v55 = vmul.f32 32.0, %v54
    %v56 = vsub.f32 1.0, %v55
    %v57 = vmul.f32 %v54, %v56
    %v58 = vadd.f32 %v54, %v57
    %vm59 = vweird.f32 %v54
    %v60 = vsel %vm59, %v54, %v58
    %v61 = vmul.f32 %v50, %v60
    %v62 = vmul.f32 %v53, %v60
    %v63 = vsub.f32 %v45, %v61
    %v64 = vsub.f32 %v46, %v62
    %v65 = vmul.f32 %v63, %v63
    %v66 = vmul.f32 %v64, %v64
    %v67 = vsel %vm47, %v65, 0.0
    %68 = vadd.xlane.f32.xlu0 %v67
    %v69 = vpop.xlane.xlu0 %68
    %v70 = vsel %vm47, %v66, 0.0
    %71 = vadd.xlane.f32.xlu0 %v70
    %v72 = vpop.xlane.xlu0 %71
    %v73 = vmul.f32 %v69, 0.032258064
    %v74 = vmul.f32 %v72, 0.032258064
    %v75 = vrsqrt.pop %v73
    %v76 = vmul.f32 %v75, %v73
    %v77 = vmul.f32 %v76, %v75
    %v78 = vmul.f32 0.5, %v77
    %v79 = vsub.f32 1.5, %v78
    %v80 = vmul.f32 %v75, %v79
    %v81 = vmul.f32 %v73, %v80
    %vm82 = vcmp.eq.f32.partialorder %v73, inf
    %v83 = vsel %vm82, %v73, %v81
    %vm84 = vcmp.eq.f32.partialorder %v73, 0.0
    %v85 = vand.u32 %v73, 2147483648
    %v86 = vsel %vm84, %v85, %v83
    %v87 = vrsqrt.pop %v74
    %v88 = vmul.f32 %v87, %v74
    %v89 = vmul.f32 %v88, %v87
    %v90 = vmul.f32 0.5, %v89
    %v91 = vsub.f32 1.5, %v90
    %v92 = vmul.f32 %v87, %v91
    %v93 = vmul.f32 %v74, %v92
    %vm94 = vcmp.eq.f32.partialorder %v74, inf
    %v95 = vsel %vm94, %v74, %v93
    %vm96 = vcmp.eq.f32.partialorder %v74, 0.0
    %v97 = vand.u32 %v74, 2147483648
    %v98 = vsel %vm96, %v97, %v95
    %v99 = vadd.f32 %v86, 1e-06
    %v100 = vadd.f32 %v98, 1e-06
    %v101 = vrcp.pop %v99
    %v102 = vmul.f32 %v99, %v101
    %v103 = vsub.f32 1.0, %v102
    %v104 = vmul.f32 %v101, %v103
    %v105 = vadd.f32 %v101, %v104
    %vm106 = vweird.f32 %v99
    %vm107 = vweird.f32 %v101
    %vm108 = vmor %vm106, %vm107
    %v109 = vsel %vm108, %v101, %v105
    %v110 = vand.u32 2147483647, %v99
    %vm111 = vcmp.eq.f32.partialorder %v110, 8.507059e+37
    %v112 = vand.u32 %v99, 2147483648
    %v113 = vor.u32 1.1754944e-38, %v112
    %v114 = vsel %vm111, %v113, %v109
    %v115 = vmul.f32 1.0, %v114
    %v116 = vrcp.pop %v100
    %v117 = vmul.f32 %v100, %v116
    %v118 = vsub.f32 1.0, %v117
    %v119 = vmul.f32 %v116, %v118
    %v120 = vadd.f32 %v116, %v119
    %vm121 = vweird.f32 %v100
    %vm122 = vweird.f32 %v116
    %vm123 = vmor %vm121, %vm122
    %v124 = vsel %vm123, %v116, %v120
    %v125 = vand.u32 2147483647, %v100
    %vm126 = vcmp.eq.f32.partialorder %v125, 8.507059e+37
    %v127 = vand.u32 %v100, 2147483648
    %v128 = vor.u32 1.1754944e-38, %v127
    %v129 = vsel %vm126, %v128, %v124
    %v130 = vmul.f32 1.0, %v129
    %v131 = vld [vmem:[#allocation5] sm:$0x1]
    %v132 = vld [vmem:[%s2] sm:$0x1]
    %v133 = vmul.f32 %v63, %v115
    %v134 = vmul.f32 %v64, %v130
    %v136 = vperm.slane %v131, 0
    %v138 = vmul.f32 %v136, %v133
    %v139 = vmul.f32 %v136, %v134
    %v141 = vperm.slane %v132, 0
    %v143 = vadd.f32 %v138, %v141
    %v144 = vadd.f32 %v139, %v141
    %145 = vst.msk [vmem:[#allocation7] sm:$0xff] %vm47, %v143
    %146 = vst.msk [vmem:[#allocation7 + $0x8] sm:$0xff] %vm47, %v144
    // Predicated region
    $region22: #{tpu_custom_call.1} parent=1 // pred_check
      _
    $region23: #{tpu_custom_call.1} parent=1 // pred_check_branch
      %148 = sbr.rel (0) target = $region25
    $region24: #{tpu_custom_call.1} parent=1 // pred_region
      %150 = vsyncadd [#allocation4], 0
      %s151 = sshll.u32 [#allocation7], 4
      %s152 = int_to_ptr.vmem [resolvable:$true] %s151
      %s153 = sshll.u32 %s3, 4
      %s154 = int_to_ptr.hbm [resolvable:$true] %s153
      %159 = dma.vmem_to_hbm [thread:$0]  %s152, 256, %s154, [#allocation4], 128, 128, 8
    $region25: #{tpu_custom_call.1} parent=1 // pred_fallthru
      _
    // Predicated region
    $region26: #{tpu_custom_call.1} parent=1 // pred_check
      _
    $region27: #{tpu_custom_call.1} parent=1 // pred_check_branch
      %161 = sbr.rel (0) target = $region29
    $region28: #{tpu_custom_call.1} parent=1 // pred_region
      %163 = dma.done [#allocation4], 256
    $region29: #{tpu_custom_call.1} parent=1 // pred_fallthru
      _
    %164 = vsyncpa [#allocation3], 1
    %165 = vsyncpa [#allocation6], 1
    %166 = vsyncpa [#allocation4], 1

</llo_original>
